<compile_context>
chip_gen: v5e
topology: v5e:2x2
jax: 0.10.0
libtpu: 0.0.40
codegen_flags: <defaults>
</compile_context>

<pallas_src>
import functools
import math

import jax
import jax.numpy as jnp
from jax.experimental import pallas as pl
from jax.experimental.pallas import tpu as pltpu


# ----------------------------------------------------------------------------
# tiling helper
# ----------------------------------------------------------------------------
def _pick_tile(dim, target, unit):
    """Largest multiple-of-`unit` divisor of `dim` that is <= target, else full dim."""
    if dim <= target:
        return dim
    t = (target // unit) * unit
    while t >= unit:
        if dim % t == 0:
            return t
        t -= unit
    return dim


# ----------------------------------------------------------------------------
# tiled linear projection: out = x @ w_t   (w_t already (K, N))
# ----------------------------------------------------------------------------
def _linear_kernel(x_ref, w_ref, o_ref, acc_ref):
    @pl.when(pl.program_id(2) == 0)
    def _init():
        acc_ref[...] = jnp.zeros_like(acc_ref)

    acc_ref[...] += jnp.dot(
        x_ref[...], w_ref[...], preferred_element_type=jnp.float32
    )

    @pl.when(pl.program_id(2) == pl.num_programs(2) - 1)
    def _store():
        o_ref[...] = acc_ref[...].astype(o_ref.dtype)


def linear_pallas(x, w_t, out_dtype=None, *, tm=256, tn=512, tk=512):
    """x: (M, K); w_t: (K, N) pre-transposed weight.  Returns (M, N)."""
    M, K = x.shape
    _, N = w_t.shape
    tm = _pick_tile(M, tm, 8)
    tn = _pick_tile(N, tn, 128)
    tk = _pick_tile(K, tk, 128)
    out_dtype = out_dtype or x.dtype
    return pl.pallas_call(
        _linear_kernel,
        out_shape=jax.ShapeDtypeStruct((M, N), out_dtype),
        grid=(M // tm, N // tn, K // tk),
        in_specs=[
            pl.BlockSpec((tm, tk), lambda i, j, k: (i, k)),
            pl.BlockSpec((tk, tn), lambda i, j, k: (k, j)),
        ],
        out_specs=pl.BlockSpec((tm, tn), lambda i, j, k: (i, j)),
        scratch_shapes=[pltpu.VMEM((tm, tn), jnp.float32)],
        compiler_params=pltpu.CompilerParams(
            dimension_semantics=("parallel", "parallel", "arbitrary")
        ),
    )(x, w_t)


# ----------------------------------------------------------------------------
# flash-style differential attention
# ----------------------------------------------------------------------------
def _diff_attn_kernel(
    lam_ref, q_ref, k_ref, v_ref, rmsw_ref, o_ref,
    m1, l1, acc1, m2, l2, acc2,
    *, scale, lambda_init, eps, compute_dtype,
):
    ki = pl.program_id(3)

    @pl.when(ki == 0)
    def _init():
        m1[...] = jnp.full_like(m1, -jnp.inf)
        m2[...] = jnp.full_like(m2, -jnp.inf)
        l1[...] = jnp.zeros_like(l1)
        l2[...] = jnp.zeros_like(l2)
        acc1[...] = jnp.zeros_like(acc1)
        acc2[...] = jnp.zeros_like(acc2)

    # q_ref / k_ref carry both sub-head branches: kernel view (2, TQ, d2) / (2, TK, d2).
    # Scale folded into q (cheap (TQ, d2) multiply in f32), MXU operands in
    # compute_dtype (bf16) with f32 accumulation.
    q1 = (q_ref[0].astype(jnp.float32) * scale).astype(compute_dtype)
    q2 = (q_ref[1].astype(jnp.float32) * scale).astype(compute_dtype)
    k1 = k_ref[0].astype(compute_dtype)
    k2 = k_ref[1].astype(compute_dtype)
    v = v_ref[...].astype(compute_dtype)

    # QK^T expressed as a last-dim contraction on both operands: the MXU
    # consumes k directly, no in-kernel transpose.
    dn = (((1,), (1,)), ((), ()))
    s1 = jax.lax.dot_general(q1, k1, dn, preferred_element_type=jnp.float32)
    s2 = jax.lax.dot_general(q2, k2, dn, preferred_element_type=jnp.float32)

    def _online(s, m, l, acc):
        m_new = jnp.maximum(m[...], jnp.max(s, axis=-1, keepdims=True))
        p = jnp.exp(s - m_new)
        alpha = jnp.exp(m[...] - m_new)
        l[...] = alpha * l[...] + jnp.sum(p, axis=-1, keepdims=True)
        acc[...] = alpha * acc[...] + jnp.dot(
            p.astype(compute_dtype), v, preferred_element_type=jnp.float32
        )
        m[...] = m_new

    _online(s1, m1, l1, acc1)
    _online(s2, m2, l2, acc2)

    @pl.when(ki == pl.num_programs(3) - 1)
    def _finalize():
        lam = lam_ref[0, 0]
        o1 = acc1[...] * pl.reciprocal(l1[...], approx=True)
        o2 = acc2[...] * pl.reciprocal(l2[...], approx=True)
        out = o1 - lam * o2
        ms = jnp.mean(out * out, axis=-1, keepdims=True)
        out = out * jax.lax.rsqrt(ms + eps) * rmsw_ref[...]
        o_ref[...] = ((1.0 - lambda_init) * out).astype(o_ref.dtype)


def diff_attention_pallas(
    q5, k5, v4, lam, rms_w, *, lambda_init, eps=1e-6,
    compute_dtype=jnp.bfloat16, tq_target=256, tk_target=512,
):
    """q5/k5: (B, 2, NH, S, d2); v4: (B, NH, S, hd); lam: (1,1) f32; rms_w: (1, hd)."""
    B, _, NH, S, d2 = q5.shape
    hd = v4.shape[-1]
    TQ = _pick_tile(S, tq_target, 8)
    TK = _pick_tile(S, tk_target, 8)
    nq, nk = S // TQ, S // TK
    scale = 1.0 / math.sqrt(d2)

    kernel = functools.partial(
        _diff_attn_kernel, scale=scale, lambda_init=lambda_init, eps=eps,
        compute_dtype=compute_dtype,
    )
    # both branches delivered in one block (leading block dim = 2)
    q_spec = pl.BlockSpec((None, 2, None, TQ, d2), lambda b, h, qi, ki: (b, 0, h, qi, 0))
    k_spec = pl.BlockSpec((None, 2, None, TK, d2), lambda b, h, qi, ki: (b, 0, h, ki, 0))
    v_spec = pl.BlockSpec((None, None, TK, hd), lambda b, h, qi, ki: (b, h, ki, 0))
    o_spec = pl.BlockSpec((None, None, TQ, hd), lambda b, h, qi, ki: (b, h, qi, 0))

    return pl.pallas_call(
        kernel,
        out_shape=jax.ShapeDtypeStruct((B, NH, S, hd), compute_dtype),
        grid=(B, NH, nq, nk),
        in_specs=[
            pl.BlockSpec((1, 1), lambda b, h, qi, ki: (0, 0),
                         memory_space=pltpu.MemorySpace.SMEM),   # lambda_sum
            q_spec,                                               # q (both branches)
            k_spec,                                               # k (both branches)
            v_spec,                                               # v
            pl.BlockSpec((1, hd), lambda b, h, qi, ki: (0, 0)),   # rms weight
        ],
        out_specs=o_spec,
        scratch_shapes=[
            pltpu.VMEM((TQ, 1), jnp.float32),    # m1
            pltpu.VMEM((TQ, 1), jnp.float32),    # l1
            pltpu.VMEM((TQ, hd), jnp.float32),   # acc1
            pltpu.VMEM((TQ, 1), jnp.float32),    # m2
            pltpu.VMEM((TQ, 1), jnp.float32),    # l2
            pltpu.VMEM((TQ, hd), jnp.float32),   # acc2
        ],
        compiler_params=pltpu.CompilerParams(
            dimension_semantics=("parallel", "parallel", "parallel", "arbitrary")
        ),
    )(lam, q5, k5, v4, rms_w)


# ----------------------------------------------------------------------------
# Module wrapper (deterministic synthetic parameters)
# ----------------------------------------------------------------------------
class MultiHeadDifferentialAttentionPallas:
    def __init__(self, hidden_size, num_heads, layer_id, key,
                 compute_dtype=jnp.bfloat16):
        self.hidden_size = hidden_size
        self.num_heads = num_heads
        self.head_dim = hidden_size // num_heads
        self.qk_head_dim = self.head_dim // 2
        self.lambda_init = 0.8 - 0.6 * math.exp(-0.3 * layer_id)
        self.eps = 1e-6
        self.compute_dtype = compute_dtype

        ks = jax.random.split(key, 8)

        def init_w(k, shape, s):
            w = (s * jax.random.normal(k, shape)).astype(jnp.float32)
            # keep parameters exactly representable in the MXU compute dtype so the
            # f32 reference and the bf16 kernels use identical weights.
            return w.astype(compute_dtype).astype(jnp.float32)

        # nn.Linear(hidden, hidden, bias=False) weights: (out, in), f32 for reference
        self._Wq = init_w(ks[0], (hidden_size, hidden_size), 0.02)
        self._Wk = init_w(ks[1], (hidden_size, hidden_size), 0.02)
        self._Wv = init_w(ks[2], (hidden_size, hidden_size), 0.02)
        self._Wo = init_w(ks[3], (hidden_size, hidden_size), 0.02)
        # pre-transposed (in, out) compute-dtype copies consumed by the kernels
        self.Wq_t = jnp.transpose(self._Wq).astype(compute_dtype)
        self.Wk_t = jnp.transpose(self._Wk).astype(compute_dtype)
        self.Wv_t = jnp.transpose(self._Wv).astype(compute_dtype)
        self.Wo_t = jnp.transpose(self._Wo).astype(compute_dtype)

        # lambda parameters ~ N(0, 0.1)
        init_p = lambda k: (0.1 * jax.random.normal(k, (self.head_dim,))).astype(jnp.float32)
        self.lambda_q1 = init_p(ks[4])
        self.lambda_k1 = init_p(ks[5])
        self.lambda_q2 = init_p(ks[6])
        self.lambda_k2 = init_p(ks[7])
        # RMSNorm(head_dim) weight
        self.rms_w = jnp.ones((self.head_dim,), jnp.float32)
        # TODO(synk): is_rope=True path (RoPE on q/k) not implemented; module default is False.
        # TODO(synk): optional attention mask not implemented; module default is None
        #             (if added, it must mask BOTH softmax branches inside the online update).

    def _lambda_sum(self):
        l1 = jnp.exp(jnp.sum(self.lambda_q1 * self.lambda_k1))
        l2 = jnp.exp(jnp.sum(self.lambda_q2 * self.lambda_k2))
        return (l1 - l2 + self.lambda_init).reshape(1, 1).astype(jnp.float32)

    def __call__(self, q, k, v):
        B, S, H = q.shape
        nh, hd, d2 = self.num_heads, self.head_dim, self.qk_head_dim
        cdt = self.compute_dtype

        # projections (tiled Pallas matmuls, bf16 activations out)
        qp = linear_pallas(q.reshape(B * S, H).astype(cdt), self.Wq_t, cdt).reshape(B, S, H)
        kp = linear_pallas(k.reshape(B * S, H).astype(cdt), self.Wk_t, cdt).reshape(B, S, H)
        vp = linear_pallas(v.reshape(B * S, H).astype(cdt), self.Wv_t, cdt).reshape(B, S, H)

        # head split (glue): (B,S,nh,2,d2).transpose -> (B,2,nh,S,d2)
        # TODO(synk): fold the head split/merge into BlockSpec index_maps when
        #             qk_head_dim is a multiple of 128 to drop these HBM round-trips.
        q5 = jnp.transpose(qp.reshape(B, S, nh, 2, d2), (0, 3, 2, 1, 4))
        k5 = jnp.transpose(kp.reshape(B, S, nh, 2, d2), (0, 3, 2, 1, 4))
        v4 = jnp.transpose(vp.reshape(B, S, nh, hd), (0, 2, 1, 3))       # (B,nh,S,hd)

        lam = self._lambda_sum()
        attn = diff_attention_pallas(
            q5, k5, v4, lam, self.rms_w.reshape(1, hd),
            lambda_init=self.lambda_init, eps=self.eps, compute_dtype=cdt,
        )  # (B, nh, S, hd) in compute dtype

        out = jnp.transpose(attn, (0, 2, 1, 3)).reshape(B * S, H).astype(cdt)
        out = linear_pallas(out, self.Wo_t, out_dtype=jnp.float32)
        return out.reshape(B, S, H)

    # pure-JAX f32 reference (module semantics)
    def reference(self, q, k, v):
        B, S, H = q.shape
        nh, hd, d2 = self.num_heads, self.head_dim, self.qk_head_dim
        qp = (q.reshape(B * S, H) @ self._Wq.T).reshape(B, S, H)
        kp = (k.reshape(B * S, H) @ self._Wk.T).reshape(B, S, H)
        vp = (v.reshape(B * S, H) @ self._Wv.T).reshape(B, S, H)
        q5 = jnp.transpose(qp.reshape(B, S, nh, 2, d2), (0, 3, 2, 1, 4))
        k5 = jnp.transpose(kp.reshape(B, S, nh, 2, d2), (0, 3, 2, 1, 4))
        v4 = jnp.transpose(vp.reshape(B, S, nh, hd), (0, 2, 1, 3))
        scores = jnp.einsum("bxhqd,bxhkd->bxhqk", q5, k5) / math.sqrt(d2)
        lam = (jnp.exp(jnp.sum(self.lambda_q1 * self.lambda_k1))
               - jnp.exp(jnp.sum(self.lambda_q2 * self.lambda_k2))
               + self.lambda_init)
        w = (jax.nn.softmax(scores[:, 0], axis=-1)
             - lam * jax.nn.softmax(scores[:, 1], axis=-1))
        out = jnp.einsum("bhqk,bhkd->bhqd", w, v4)
        ms = jnp.mean(out * out, axis=-1, keepdims=True)
        out = out * jax.lax.rsqrt(ms + self.eps) * self.rms_w
        out = (1.0 - self.lambda_init) * out
        out = jnp.transpose(out, (0, 2, 1, 3)).reshape(B, S, H)
        return (out.reshape(B * S, H) @ self._Wo.T).reshape(B, S, H)


# ----------------------------------------------------------------------------
if __name__ == "__main__":
    B, S, H, NH = 2, 8, 32, 4   # hidden=32, heads=4 -> head_dim=8, qk_head_dim=4
    key = jax.random.PRNGKey(0)
    kq, kk, kv, kparams = jax.random.split(key, 4)

    def bf16_repr(k, shape):
        return jax.random.normal(k, shape, jnp.float32).astype(jnp.bfloat16).astype(jnp.float32)

    q = bf16_repr(kq, (B, S, H))
    k = bf16_repr(kk, (B, S, H))
    v = bf16_repr(kv, (B, S, H))

    module = MultiHeadDifferentialAttentionPallas(H, NH, layer_id=1, key=kparams)

    out = jax.block_until_ready(module(q, k, v))
    ref = jax.block_until_ready(module.reference(q, k, v))

    assert out.shape == (B, S, H), out.shape
    err = float(jnp.max(jnp.abs(out.astype(jnp.float32) - ref)))
    # bf16 MXU inputs / bf16 activations vs f32 reference -> relaxed tolerance
    assert err < 2e-2, err

    print("KERNEL_OK")
</pallas_src>

<mosaic_0001>
module attributes {stable_mosaic.version = 11 : i64} {
  func.func @_linear_kernel(%arg0: i32, %arg1: i32, %arg2: i32, %arg3: memref<16x32xbf16, #tpu.memory_space<vmem>>, %arg4: memref<32x32xbf16, #tpu.memory_space<vmem>>, %arg5: memref<16x32xbf16, #tpu.memory_space<vmem>>, %arg6: memref<16x32xf32, #tpu.memory_space<vmem>>) attributes {dimension_semantics = [#tpu.dimension_semantics<parallel>, #tpu.dimension_semantics<parallel>, #tpu.dimension_semantics<arbitrary>], iteration_bounds = array<i64: 1, 1, 1>, scalar_prefetch = 0 : i64, scratch_operands = 1 : i64, tpu.core_type = #tpu.core_type<tc>, window_params = [{transform_indices = @transform_0, window_bounds = array<i64: 16, 32>}, {transform_indices = @transform_1, window_bounds = array<i64: 32, 32>}, {transform_indices = @transform_2, window_bounds = array<i64: 16, 32>}]} {
    %c0_i32 = arith.constant 0 : i32
    %0 = arith.cmpi eq, %arg2, %c0_i32 : i32
    %1 = arith.extui %0 : i1 to i32
    %c0_i32_0 = arith.constant 0 : i32
    %2 = arith.cmpi ne, %1, %c0_i32_0 : i32
    scf.if %2 {
      %cst_10 = arith.constant 0.000000e+00 : f32
      %12 = vector.broadcast %cst_10 : f32 to vector<16x32xf32>
      %c0_11 = arith.constant 0 : index
      %c0_12 = arith.constant 0 : index
      %13 = vector.load %arg6[%c0_11, %c0_12] : memref<16x32xf32, #tpu.memory_space<vmem>>, vector<16x32xf32>
      tpu.vector_store %arg6[%c0_11, %c0_12], %12 {strides = array<i32>} : memref<16x32xf32, #tpu.memory_space<vmem>>, vector<16x32xf32>,
    } else {
    }
    %c0 = arith.constant 0 : index
    %c0_1 = arith.constant 0 : index
    %3 = vector.load %arg6[%c0, %c0_1] : memref<16x32xf32, #tpu.memory_space<vmem>>, vector<16x32xf32>
    %c0_2 = arith.constant 0 : index
    %c0_3 = arith.constant 0 : index
    %4 = vector.load %arg3[%c0_2, %c0_3] : memref<16x32xbf16, #tpu.memory_space<vmem>>, vector<16x32xbf16>
    %c0_4 = arith.constant 0 : index
    %c0_5 = arith.constant 0 : index
    %5 = vector.load %arg4[%c0_4, %c0_5] : memref<32x32xbf16, #tpu.memory_space<vmem>>, vector<32x32xbf16>
    %cst = arith.constant dense<0.000000e+00> : vector<16x32xf32>
    %6 = tpu.matmul %4, %5, %cst {dimension_numbers = #tpu.dot_dimension_numbers<[1], [0], [0], [1], [0, 0, 1, 1], [], []>} : vector<16x32xbf16>, vector<32x32xbf16>, vector<16x32xf32> -> vector<16x32xf32>
    %7 = arith.addf %3, %6 : vector<16x32xf32>
    %c0_6 = arith.constant 0 : index
    %c0_7 = arith.constant 0 : index
    %8 = vector.load %arg6[%c0_6, %c0_7] : memref<16x32xf32, #tpu.memory_space<vmem>>, vector<16x32xf32>
    tpu.vector_store %arg6[%c0_6, %c0_7], %7 {strides = array<i32>} : memref<16x32xf32, #tpu.memory_space<vmem>>, vector<16x32xf32>,
    %c0_i32_8 = arith.constant 0 : i32
    %9 = arith.cmpi eq, %arg2, %c0_i32_8 : i32
    %10 = arith.extui %9 : i1 to i32
    %c0_i32_9 = arith.constant 0 : i32
    %11 = arith.cmpi ne, %10, %c0_i32_9 : i32
    scf.if %11 {
      %c0_10 = arith.constant 0 : index
      %c0_11 = arith.constant 0 : index
      %12 = vector.load %arg6[%c0_10, %c0_11] : memref<16x32xf32, #tpu.memory_space<vmem>>, vector<16x32xf32>
      %13 = arith.truncf %12 : vector<16x32xf32> to vector<16x32xbf16>
      %c0_12 = arith.constant 0 : index
      %c0_13 = arith.constant 0 : index
      %14 = vector.load %arg5[%c0_12, %c0_13] : memref<16x32xbf16, #tpu.memory_space<vmem>>, vector<16x32xbf16>
      tpu.vector_store %arg5[%c0_12, %c0_13], %13 {strides = array<i32>} : memref<16x32xbf16, #tpu.memory_space<vmem>>, vector<16x32xbf16>,
    } else {
    }
    return
  }
  func.func @transform_0(%arg0: i32, %arg1: i32, %arg2: i32) -> (i32, i32) {
    %c0_i32 = arith.constant 0 : i32
    return %arg0, %arg2 : i32, i32
  }
  func.func @transform_1(%arg0: i32, %arg1: i32, %arg2: i32) -> (i32, i32) {
    %c0_i32 = arith.constant 0 : i32
    return %arg2, %arg1 : i32, i32
  }
  func.func @transform_2(%arg0: i32, %arg1: i32, %arg2: i32) -> (i32, i32) {
    %c0_i32 = arith.constant 0 : i32
    return %arg0, %arg1 : i32, i32
  }
}

</mosaic_0001>

<llo_original>
// kernel: tpu_custom_call.1
$region0: #{tpu_custom_call.1}
  #allocation0 [shape = 'u32[]', space=smem, size = 0x4, offset = 0x4, fixed_abs, tag = 'smem constant byte address 0x4 - core index']
  #allocation1 [shape = 'u32[72,128]{1,0:T(1,128)}', space=vmem, size = 0x9000, scoped, tag = 'internal scratch']
  #allocation2 [shape = 'f32[16,32]{1,0:T(8,128)}', space=vmem, size = 0x2000, scoped, tag = 'scratch operand']
  %s0 = inlined_call_operand.hbm [shape: bf16[16,32], index: 0, kind: input, shape index: {}]
  %s1 = inlined_call_operand.hbm [shape: bf16[32,32], index: 1, kind: input, shape index: {}]
  %s2 = inlined_call_operand.hbm [shape: bf16[16,32], index: 2, kind: output, shape index: {}]
  %s3 = sld [smem:[#allocation0]]
  $region34: #{tpu_custom_call.1} parent=0
    _
  %s5 = ssub.s32 1, %s3
  %s6 = scalar_select 0, %s5, %s3
  $region1: #{tpu_custom_call.1} parent=0
    #allocation3 [shape = 'u8[4096]{0}', space=vmem, size = 0x1000, scoped, tag = 'input window, operand 0, single buffered']
    #allocation4 [shape = 's32[1]{0}', space=sflag, size = 0x4, scoped, tag = 'scoped memory for tpu_custom_call.1']
    #allocation5 [shape = 's32[1]{0}', space=sflag, size = 0x4, scoped, tag = 'scoped memory for tpu_custom_call.1']
    #allocation6 [shape = 'u8[8192]{0}', space=vmem, size = 0x2000, scoped, tag = 'input window, operand 1, single buffered']
    #allocation7 [shape = 's32[1]{0}', space=sflag, size = 0x4, scoped, tag = 'scoped memory for tpu_custom_call.1']
    #allocation8 [shape = 'u8[4096]{0}', space=vmem, size = 0x1000, scoped, tag = 'output window, operand 0, single buffered']
    %7 = vsyncpa [#allocation4], 0
    %8 = vsyncpa [#allocation7], 0
    %9 = vsyncpa [#allocation5], 0
    // Predicated region
    $region2: #{tpu_custom_call.1} parent=1 // pred_check
      _
    $region3: #{tpu_custom_call.1} parent=1 // pred_check_branch
      %11 = sbr.rel (0) target = $region5
    $region4: #{tpu_custom_call.1} parent=1 // pred_region
      %13 = vsyncadd [#allocation4], 0
      %s14 = sshll.u32 %s0, 4
      %s15 = int_to_ptr.hbm [resolvable:$true] %s14
      %s16 = sshll.u32 [#allocation3], 4
      %s17 = int_to_ptr.vmem [resolvable:$true] %s16
      %22 = dma.hbm_to_vmem [thread:$0]  %s15, 128, %s17, [#allocation4], 64, 64, 4
    $region5: #{tpu_custom_call.1} parent=1 // pred_fallthru
      _
    // Predicated region
    $region6: #{tpu_custom_call.1} parent=1 // pred_check
      _
    $region7: #{tpu_custom_call.1} parent=1 // pred_check_branch
      %24 = sbr.rel (0) target = $region9
    $region8: #{tpu_custom_call.1} parent=1 // pred_region
      %26 = vsyncadd [#allocation7], 0
      %s27 = sshll.u32 %s1, 4
      %s28 = int_to_ptr.hbm [resolvable:$true] %s27
      %s29 = sshll.u32 [#allocation6], 4
      %s30 = int_to_ptr.vmem [resolvable:$true] %s29
      %35 = dma.hbm_to_vmem [thread:$0]  %s28, 256, %s30, [#allocation7], 64, 64, 4
    $region9: #{tpu_custom_call.1} parent=1 // pred_fallthru
      _
    // Predicated region
    $region10: #{tpu_custom_call.1} parent=1 // pred_check
      _
    $region11: #{tpu_custom_call.1} parent=1 // pred_check_branch
      %37 = sbr.rel (0) target = $region13
    $region12: #{tpu_custom_call.1} parent=1 // pred_region
      %39 = dma.done [#allocation4], 128
    $region13: #{tpu_custom_call.1} parent=1 // pred_fallthru
      _
    // Predicated region
    $region14: #{tpu_custom_call.1} parent=1 // pred_check
      _
    $region15: #{tpu_custom_call.1} parent=1 // pred_check_branch
      %41 = sbr.rel (0) target = $region17
    $region16: #{tpu_custom_call.1} parent=1 // pred_region
      %43 = dma.done [#allocation7], 256
    $region17: #{tpu_custom_call.1} parent=1 // pred_fallthru
      _
    %p45 = scmp.eq.s32.totalorder 0, 0
    // Predicated region
    $region18: #{tpu_custom_call.1} parent=1 // pred_check
      %p46 = pneg %p45
    $region19: #{tpu_custom_call.1} parent=1 // pred_check_branch
      %48 = sbr.rel (%p46) target = $region21
    $region20: #{tpu_custom_call.1} parent=1 // pred_region
      %vm49 = vcmask 261120
      %50 = vst.msk [vmem:[#allocation2] sm:$0xff] %vm49, 0.0
      %51 = vst.msk [vmem:[#allocation2 + $0x8] sm:$0xff] %vm49, 0.0
    $region21: #{tpu_custom_call.1} parent=1 // pred_fallthru
      _
    %v52 = vld [vmem:[#allocation2] sm:$0xff]
    %v53 = vld [vmem:[#allocation2 + $0x8] sm:$0xff]
    %v54 = vld [vmem:[#allocation3] sm:$0xf]
    %v55 = vld [vmem:[#allocation3 + $0x4] sm:$0xf]
    %v56 = vld [vmem:[#allocation6] sm:$0xf]
    %v57 = vld [vmem:[#allocation6 + $0x4] sm:$0xf]
    %v58 = vld [vmem:[#allocation6 + $0x8] sm:$0xf]
    %v59 = vld [vmem:[#allocation6 + $0xc] sm:$0xf]
    %v62 = vunpack.c.l.b16 %v54
    %v63 = vunpack.c.l.b16 %v55
    %v64 = vpack.c.b16 %v63, %v62
    %v69 = vunpack.c.l.b16 %v56
    %v70 = vunpack.c.l.b16 %v57
    %v71 = vunpack.c.l.b16 %v58
    %v72 = vunpack.c.l.b16 %v59
    %v73 = vpack.c.b16 %v70, %v69
    %v74 = vpack.c.b16 %v72, %v71
    %vm77 = vcmask 261120
    %v79 = vsel %vm77, %v64, 0
    %81 = vmatpush.bf16.msra.mxu0 0
    %82 = vmatpush.bf16.msra.mxu0 0
    %83 = vmatpush.bf16.msra.mxu0 0
    %84 = vmatpush.bf16.msra.mxu0 0
    %85 = vmatpush.bf16.msra.mxu0 0
    %86 = vmatpush.bf16.msra.mxu0 0
    %87 = vmatpush.bf16.msra.mxu0 %v74
    %88 = vmatpush.bf16.msra.mxu0 %v73
    %89 = vmatmul.bf16.gmra.mxu0 %v79
    %v90 = vpop.f32.mrf.mxu0
    %v91 = vadd.f32 0.0, %v90
    %v92 = vpop.f32.mrf.mxu0
    %v93 = vadd.f32 0.0, %v92
    %94 = vdwg.mxu0
    %v95 = vadd.f32 %v52, %v91
    %v96 = vadd.f32 %v53, %v93
    %97 = vst.msk [vmem:[#allocation2] sm:$0xff] %vm77, %v95
    %98 = vst.msk [vmem:[#allocation2 + $0x8] sm:$0xff] %vm77, %v96
    // Predicated region
    $region22: #{tpu_custom_call.1} parent=1 // pred_check
      %p99 = pneg %p45
    $region23: #{tpu_custom_call.1} parent=1 // pred_check_branch
      %101 = sbr.rel (%p99) target = $region25
    $region24: #{tpu_custom_call.1} parent=1 // pred_region
      %v102 = vld [vmem:[#allocation2] sm:$0xff]
      %v103 = vld [vmem:[#allocation2 + $0x8] sm:$0xff]
      %v104 = vpack.c.bf16 %v102, %v102
      %v105 = vpack.c.bf16 %v103, %v103
      %vm106 = vcmask 257024
      %107 = vst.msk [vmem:[#allocation8] sm:$0xf] %vm106, %v104
      %108 = vst.msk [vmem:[#allocation8 + $0x4] sm:$0xf] %vm106, %v105
    $region25: #{tpu_custom_call.1} parent=1 // pred_fallthru
      _
    // Predicated region
    $region26: #{tpu_custom_call.1} parent=1 // pred_check
      _
    $region27: #{tpu_custom_call.1} parent=1 // pred_check_branch
      %110 = sbr.rel (0) target = $region29
    $region28: #{tpu_custom_call.1} parent=1 // pred_region
      %112 = vsyncadd [#allocation5], 0
      %s113 = sshll.u32 [#allocation8], 4
      %s114 = int_to_ptr.vmem [resolvable:$true] %s113
      %s115 = sshll.u32 %s2, 4
      %s116 = int_to_ptr.hbm [resolvable:$true] %s115
      %121 = dma.vmem_to_hbm [thread:$0]  %s114, 128, %s116, [#allocation5], 64, 64, 4
    $region29: #{tpu_custom_call.1} parent=1 // pred_fallthru
      _
    // Predicated region
    $region30: #{tpu_custom_call.1} parent=1 // pred_check
      _
    $region31: #{tpu_custom_call.1} parent=1 // pred_check_branch
      %123 = sbr.rel (0) target = $region33
    $region32: #{tpu_custom_call.1} parent=1 // pred_region
      %125 = dma.done [#allocation5], 128
    $region33: #{tpu_custom_call.1} parent=1 // pred_fallthru
      _
    %126 = vsyncpa [#allocation4], 1
    %127 = vsyncpa [#allocation7], 1
    %128 = vsyncpa [#allocation5], 1

</llo_original>
